<compile_context>
chip_gen: v5e
topology: v5e:2x2
jax: 0.10.0
libtpu: 0.0.40
codegen_flags: <defaults>
</compile_context>

<pallas_src>
import numpy as np
import jax
import jax.numpy as jnp
from jax.experimental import pallas as pl
from jax.experimental.pallas import tpu as pltpu

OUT_LANES = 128   # lane-dense padded width of the kernel's HBM-visible output


# ----------------------------- Pallas kernel -------------------------------

def fused_forward_kernel(x_ref, wc1_ref, bc1_ref, wc2_ref, bc2_ref,
                         w1_ref, b1_ref, w2_ref, b2_ref, o_ref):
    """Entire CNNClassifier forward: 4 chained matmuls, everything in VMEM.

    x_ref:   (B, T*D)         time-major flattened input
    wc*_ref: (T*Cin, T*Cout)  block-Toeplitz conv-as-matmul weights (pad baked in)
    bc*_ref: (1, T*Cout)      per-timestep tiled conv biases
    w1_ref:  (T*C2, H)        fc1 weight, rows permuted to time-major flatten order
    b1_ref:  (1, H)
    w2_ref:  (H, 128)         fc2 weight, zero-padded to 128 output lanes
    b2_ref:  (1, 128)
    o_ref:   (B, 128)         lane-dense padded logits
    """
    h = jnp.dot(x_ref[...], wc1_ref[...], preferred_element_type=jnp.float32)
    h = jnp.maximum(h + bc1_ref[...], 0.0)                    # conv1 + ReLU
    h = jnp.dot(h, wc2_ref[...], preferred_element_type=jnp.float32)
    h = jnp.maximum(h + bc2_ref[...], 0.0)                    # conv2 + ReLU
    z = jnp.dot(h, w1_ref[...], preferred_element_type=jnp.float32)
    z = jnp.maximum(z + b1_ref[...], 0.0)                     # fc1 + ReLU
    o_ref[...] = (jnp.dot(z, w2_ref[...], preferred_element_type=jnp.float32)
                  + b2_ref[...])                              # fc2 (identity act)


_VMEM = pl.BlockSpec(memory_space=pltpu.MemorySpace.VMEM)


def cnn_classifier_forward(fused_params, x_btd, output_dim):
    """Fused forward. x_btd: (B, T, D) -> (B, output_dim)."""
    B = x_btd.shape[0]
    x_flat = x_btd.reshape(B, -1)     # time-major flatten of contiguous dims (cheap)
    out_pad = pl.pallas_call(
        fused_forward_kernel,
        out_shape=jax.ShapeDtypeStruct((B, OUT_LANES), jnp.float32),
        in_specs=[_VMEM] * 9,
        out_specs=_VMEM,
    )(x_flat, *fused_params)
    return out_pad[:, :output_dim]


# ----------------------------- Param preparation ---------------------------

def _conv_to_toeplitz(w_oik, T):
    """Fold a 'same'-padded, stride-1 Conv1d weight (Cout, Cin, K) into a
    (T*Cin, T*Cout) matmul weight acting on time-major flattened activations.

    W[t_in*Cin + cin, t_out*Cout + o] = w[o, cin, t_in - t_out + pad]
    (zero where the tap would read outside [0, T) — this IS the zero padding).
    """
    w = np.asarray(w_oik, np.float32)
    Cout, Cin, K = w.shape
    pad = (K - 1) // 2
    W = np.zeros((T * Cin, T * Cout), np.float32)
    for t_out in range(T):
        for k in range(K):
            t_in = t_out + k - pad
            if 0 <= t_in < T:
                W[t_in * Cin:(t_in + 1) * Cin,
                  t_out * Cout:(t_out + 1) * Cout] = w[:, :, k].T
    return jnp.asarray(W)


def prepare_fused_params(params, T, output_dim):
    """One-time host-side folding of conv/flatten/padding into matmul weights."""
    (wc1, bc1, _p1), (wc2, bc2, _p2) = params["conv"]
    w1, b1, w2, b2 = params["fc"]
    C1 = wc1.shape[0]
    C2 = wc2.shape[0]
    H = w1.shape[1]

    Wc1 = _conv_to_toeplitz(wc1, T)
    Bc1 = jnp.tile(bc1, T).reshape(1, T * C1)
    Wc2 = _conv_to_toeplitz(wc2, T)
    Bc2 = jnp.tile(bc2, T).reshape(1, T * C2)

    # Fold torch.flatten's channel-major index (c*T + t) into W1's rows so the
    # kernel consumes the time-major (t*C2 + c) activation directly.
    w1_perm = jnp.asarray(
        np.asarray(w1, np.float32).reshape(C2, T, H)
        .transpose(1, 0, 2).reshape(T * C2, H))
    b1_2d = jnp.asarray(b1).reshape(1, H)

    # Zero-pad the head to 128 lanes so the HBM-visible store is lane-dense.
    w2_pad = np.zeros((H, OUT_LANES), np.float32)
    w2_pad[:, :output_dim] = np.asarray(w2, np.float32)
    b2_pad = np.zeros((1, OUT_LANES), np.float32)
    b2_pad[0, :output_dim] = np.asarray(b2, np.float32)

    return (Wc1, Bc1, Wc2, Bc2, w1_perm, b1_2d,
            jnp.asarray(w2_pad), jnp.asarray(b2_pad))


# ----------------------------- Param init (PyTorch layout) -----------------

def init_params(key, T, D, conv_channels, kernel_sizes, fc_hidden, output_dim):
    params = {"conv": [], "fc": None}
    c_in = D
    keys = jax.random.split(key, 2 * len(conv_channels) + 4)
    ki = 0
    for c_out, ks in zip(conv_channels, kernel_sizes):
        w = 0.1 * jax.random.normal(keys[ki], (c_out, c_in, ks), jnp.float32)
        ki += 1
        b = 0.1 * jax.random.normal(keys[ki], (c_out,), jnp.float32)
        ki += 1
        params["conv"].append((w, b, (ks - 1) // 2))  # 'same' padding, stride 1
        c_in = c_out
    flat_dim = c_in * T                                # math.prod(cnn.output_shape)
    w1 = 0.1 * jax.random.normal(keys[ki], (flat_dim, fc_hidden), jnp.float32)
    b1 = 0.1 * jax.random.normal(keys[ki + 1], (fc_hidden,), jnp.float32)
    w2 = 0.1 * jax.random.normal(keys[ki + 2], (fc_hidden, output_dim), jnp.float32)
    b2 = 0.1 * jax.random.normal(keys[ki + 3], (output_dim,), jnp.float32)
    params["fc"] = (w1, b1, w2, b2)
    return params


# ----------------------------- Pure-JAX reference (PyTorch semantics) ------

def reference_forward(params, x_btd):
    """Mirror of the PyTorch forward: transpose -> Conv1d+ReLU stack -> flatten
    (channel-major) -> MLP. Used only for correctness checking."""
    h = jnp.transpose(x_btd, (0, 2, 1))                # (B, D, T)
    for (w, b, pad) in params["conv"]:
        h = jax.lax.conv_general_dilated(
            h, w, window_strides=(1,), padding=[(pad, pad)],
            dimension_numbers=("NCH", "OIH", "NCH"),
            precision=jax.lax.Precision.HIGHEST)
        h = jnp.maximum(h + b[None, :, None], 0.0)
    flat = h.reshape(h.shape[0], -1)                   # (B, C*T) channel-major
    w1, b1, w2, b2 = params["fc"]
    z = jnp.maximum(
        jnp.dot(flat, w1, precision=jax.lax.Precision.HIGHEST) + b1, 0.0)
    return jnp.dot(z, w2, precision=jax.lax.Precision.HIGHEST) + b2


# ----------------------------- Main ----------------------------------------

if __name__ == "__main__":
    B, T, D = 2, 16, 4          # batch, time (input_width), channels (input_channels)
    conv_channels = [8, 8]
    kernel_sizes = [3, 3]
    fc_hidden = 32
    output_dim = 5

    key = jax.random.PRNGKey(0)
    k_par, k_inp = jax.random.split(key)
    params = init_params(k_par, T, D, conv_channels, kernel_sizes,
                         fc_hidden, output_dim)
    x = jax.random.normal(k_inp, (B, T, D), jnp.float32)

    fused_params = prepare_fused_params(params, T, output_dim)
    fwd = jax.jit(lambda fp, xx: cnn_classifier_forward(fp, xx, output_dim))

    out = jax.block_until_ready(fwd(fused_params, x))

    assert out.shape == (B, output_dim), out.shape
    assert bool(jnp.all(jnp.isfinite(out)))

    ref = reference_forward(params, x)
    max_err = float(jnp.max(jnp.abs(out - ref)))
    assert bool(jnp.allclose(out, ref, rtol=1e-3, atol=1e-3)), max_err

    print("KERNEL_OK")
</pallas_src>

<mosaic_0001>
module attributes {stable_mosaic.version = 11 : i64} {
  func.func @fused_forward_kernel(%arg0: memref<2x64xf32, #tpu.memory_space<vmem>>, %arg1: memref<64x128xf32, #tpu.memory_space<vmem>>, %arg2: memref<1x128xf32, #tpu.memory_space<vmem>>, %arg3: memref<128x128xf32, #tpu.memory_space<vmem>>, %arg4: memref<1x128xf32, #tpu.memory_space<vmem>>, %arg5: memref<128x32xf32, #tpu.memory_space<vmem>>, %arg6: memref<1x32xf32, #tpu.memory_space<vmem>>, %arg7: memref<32x128xf32, #tpu.memory_space<vmem>>, %arg8: memref<1x128xf32, #tpu.memory_space<vmem>>, %arg9: memref<2x128xf32, #tpu.memory_space<vmem>>) attributes {dimension_semantics = [], scalar_prefetch = 0 : i64, scratch_operands = 0 : i64, tpu.core_type = #tpu.core_type<tc>} {
    %c0 = arith.constant 0 : index
    %c0_0 = arith.constant 0 : index
    %0 = vector.load %arg0[%c0, %c0_0] : memref<2x64xf32, #tpu.memory_space<vmem>>, vector<2x64xf32>
    %c0_1 = arith.constant 0 : index
    %c0_2 = arith.constant 0 : index
    %1 = vector.load %arg1[%c0_1, %c0_2] : memref<64x128xf32, #tpu.memory_space<vmem>>, vector<64x128xf32>
    %cst = arith.constant dense<0.000000e+00> : vector<2x128xf32>
    %2 = tpu.matmul %0, %1, %cst {dimension_numbers = #tpu.dot_dimension_numbers<[1], [0], [0], [1], [0, 0, 1, 1], [], []>} : vector<2x64xf32>, vector<64x128xf32>, vector<2x128xf32> -> vector<2x128xf32>
    %c0_3 = arith.constant 0 : index
    %c0_4 = arith.constant 0 : index
    %3 = vector.load %arg2[%c0_3, %c0_4] : memref<1x128xf32, #tpu.memory_space<vmem>>, vector<1x128xf32>
    %4 = vector.broadcast %3 : vector<1x128xf32> to vector<2x128xf32>
    %5 = arith.addf %2, %4 : vector<2x128xf32>
    %cst_5 = arith.constant 0.000000e+00 : f32
    %6 = vector.broadcast %cst_5 : f32 to vector<2x128xf32>
    %7 = arith.maximumf %5, %6 : vector<2x128xf32>
    %c0_6 = arith.constant 0 : index
    %c0_7 = arith.constant 0 : index
    %8 = vector.load %arg3[%c0_6, %c0_7] : memref<128x128xf32, #tpu.memory_space<vmem>>, vector<128x128xf32>
    %cst_8 = arith.constant dense<0.000000e+00> : vector<2x128xf32>
    %9 = tpu.matmul %7, %8, %cst_8 {dimension_numbers = #tpu.dot_dimension_numbers<[1], [0], [0], [1], [0, 0, 1, 1], [], []>} : vector<2x128xf32>, vector<128x128xf32>, vector<2x128xf32> -> vector<2x128xf32>
    %c0_9 = arith.constant 0 : index
    %c0_10 = arith.constant 0 : index
    %10 = vector.load %arg4[%c0_9, %c0_10] : memref<1x128xf32, #tpu.memory_space<vmem>>, vector<1x128xf32>
    %11 = vector.broadcast %10 : vector<1x128xf32> to vector<2x128xf32>
    %12 = arith.addf %9, %11 : vector<2x128xf32>
    %cst_11 = arith.constant 0.000000e+00 : f32
    %13 = vector.broadcast %cst_11 : f32 to vector<2x128xf32>
    %14 = arith.maximumf %12, %13 : vector<2x128xf32>
    %c0_12 = arith.constant 0 : index
    %c0_13 = arith.constant 0 : index
    %15 = vector.load %arg5[%c0_12, %c0_13] : memref<128x32xf32, #tpu.memory_space<vmem>>, vector<128x32xf32>
    %cst_14 = arith.constant dense<0.000000e+00> : vector<2x32xf32>
    %16 = tpu.matmul %14, %15, %cst_14 {dimension_numbers = #tpu.dot_dimension_numbers<[1], [0], [0], [1], [0, 0, 1, 1], [], []>} : vector<2x128xf32>, vector<128x32xf32>, vector<2x32xf32> -> vector<2x32xf32>
    %c0_15 = arith.constant 0 : index
    %c0_16 = arith.constant 0 : index
    %17 = vector.load %arg6[%c0_15, %c0_16] : memref<1x32xf32, #tpu.memory_space<vmem>>, vector<1x32xf32>
    %18 = vector.broadcast %17 : vector<1x32xf32> to vector<2x32xf32>
    %19 = arith.addf %16, %18 : vector<2x32xf32>
    %cst_17 = arith.constant 0.000000e+00 : f32
    %20 = vector.broadcast %cst_17 : f32 to vector<2x32xf32>
    %21 = arith.maximumf %19, %20 : vector<2x32xf32>
    %c0_18 = arith.constant 0 : index
    %c0_19 = arith.constant 0 : index
    %22 = vector.load %arg7[%c0_18, %c0_19] : memref<32x128xf32, #tpu.memory_space<vmem>>, vector<32x128xf32>
    %cst_20 = arith.constant dense<0.000000e+00> : vector<2x128xf32>
    %23 = tpu.matmul %21, %22, %cst_20 {dimension_numbers = #tpu.dot_dimension_numbers<[1], [0], [0], [1], [0, 0, 1, 1], [], []>} : vector<2x32xf32>, vector<32x128xf32>, vector<2x128xf32> -> vector<2x128xf32>
    %c0_21 = arith.constant 0 : index
    %c0_22 = arith.constant 0 : index
    %24 = vector.load %arg8[%c0_21, %c0_22] : memref<1x128xf32, #tpu.memory_space<vmem>>, vector<1x128xf32>
    %25 = vector.broadcast %24 : vector<1x128xf32> to vector<2x128xf32>
    %26 = arith.addf %23, %25 : vector<2x128xf32>
    %c0_23 = arith.constant 0 : index
    %c0_24 = arith.constant 0 : index
    %27 = vector.load %arg9[%c0_23, %c0_24] : memref<2x128xf32, #tpu.memory_space<vmem>>, vector<2x128xf32>
    tpu.vector_store %arg9[%c0_23, %c0_24], %26 {strides = array<i32>} : memref<2x128xf32, #tpu.memory_space<vmem>>, vector<2x128xf32>,
    return
  }
}

</mosaic_0001>

<llo_original>
// kernel: _lambda_.1
$region0: #{_lambda_.1}
  #allocation0 [shape = 'u32[]', space=smem, size = 0x4, offset = 0x4, fixed_abs, tag = 'smem constant byte address 0x4 - core index']
  #allocation1 [shape = 'u32[72,128]{1,0:T(1,128)}', space=vmem, size = 0x9000, scoped, tag = 'internal scratch']
  %s0 = inlined_call_operand.vmem [shape: f32[2,64], index: 0, kind: input, shape index: {}]
  %s1 = inlined_call_operand.vmem [shape: f32[64,128], index: 1, kind: input, shape index: {}]
  %s2 = inlined_call_operand.vmem [shape: f32[1,128], index: 2, kind: input, shape index: {}]
  %s3 = inlined_call_operand.vmem [shape: f32[128,128], index: 3, kind: input, shape index: {}]
  %s4 = inlined_call_operand.vmem [shape: f32[1,128], index: 4, kind: input, shape index: {}]
  %s5 = inlined_call_operand.vmem [shape: f32[128,32], index: 5, kind: input, shape index: {}]
  %s6 = inlined_call_operand.vmem [shape: f32[1,32], index: 6, kind: input, shape index: {}]
  %s7 = inlined_call_operand.hbm [shape: f32[32,128], index: 7, kind: input, shape index: {}]
  %s8 = inlined_call_operand.vmem [shape: f32[1,128], index: 8, kind: input, shape index: {}]
  %s9 = inlined_call_operand.hbm [shape: f32[2,128], index: 9, kind: output, shape index: {}]
  %s10 = sld [smem:[#allocation0]]
  $region50: #{_lambda_.1} parent=0
    _
  %s12 = ssub.s32 1, %s10
  %s13 = scalar_select 0, %s12, %s10
  $region1: #{_lambda_.1} parent=0
    #allocation2 [shape = 'u8[16384]{0}', space=vmem, size = 0x4000, scoped, tag = 'input window, operand 7, single buffered']
    #allocation3 [shape = 's32[1]{0}', space=sflag, size = 0x4, scoped, tag = 'scoped memory for _lambda_.1']
    #allocation4 [shape = 's32[1]{0}', space=sflag, size = 0x4, scoped, tag = 'scoped memory for _lambda_.1']
    #allocation5 [shape = 'u8[1024]{0}', space=vmem, size = 0x400, scoped, tag = 'output window, operand 0, single buffered']
    %14 = vsyncpa [#allocation3], 0
    %15 = vsyncpa [#allocation4], 0
    // Predicated region
    $region2: #{_lambda_.1} parent=1 // pred_check
      _
    $region3: #{_lambda_.1} parent=1 // pred_check_branch
      %17 = sbr.rel (0) target = $region5
    $region4: #{_lambda_.1} parent=1 // pred_region
      _
    $region5: #{_lambda_.1} parent=1 // pred_fallthru
      _
    // Predicated region
    $region6: #{_lambda_.1} parent=1 // pred_check
      _
    $region7: #{_lambda_.1} parent=1 // pred_check_branch
      %19 = sbr.rel (0) target = $region9
    $region8: #{_lambda_.1} parent=1 // pred_region
      _
    $region9: #{_lambda_.1} parent=1 // pred_fallthru
      _
    // Predicated region
    $region10: #{_lambda_.1} parent=1 // pred_check
      _
    $region11: #{_lambda_.1} parent=1 // pred_check_branch
      %21 = sbr.rel (0) target = $region13
    $region12: #{_lambda_.1} parent=1 // pred_region
      _
    $region13: #{_lambda_.1} parent=1 // pred_fallthru
      _
    // Predicated region
    $region14: #{_lambda_.1} parent=1 // pred_check
      _
    $region15: #{_lambda_.1} parent=1 // pred_check_branch
      %23 = sbr.rel (0) target = $region17
    $region16: #{_lambda_.1} parent=1 // pred_region
      _
    $region17: #{_lambda_.1} parent=1 // pred_fallthru
      _
    // Predicated region
    $region18: #{_lambda_.1} parent=1 // pred_check
      _
    $region19: #{_lambda_.1} parent=1 // pred_check_branch
      %25 = sbr.rel (0) target = $region21
    $region20: #{_lambda_.1} parent=1 // pred_region
      _
    $region21: #{_lambda_.1} parent=1 // pred_fallthru
      _
    // Predicated region
    $region22: #{_lambda_.1} parent=1 // pred_check
      _
    $region23: #{_lambda_.1} parent=1 // pred_check_branch
      %27 = sbr.rel (0) target = $region25
    $region24: #{_lambda_.1} parent=1 // pred_region
      _
    $region25: #{_lambda_.1} parent=1 // pred_fallthru
      _
    // Predicated region
    $region26: #{_lambda_.1} parent=1 // pred_check
      _
    $region27: #{_lambda_.1} parent=1 // pred_check_branch
      %29 = sbr.rel (0) target = $region29
    $region28: #{_lambda_.1} parent=1 // pred_region
      _
    $region29: #{_lambda_.1} parent=1 // pred_fallthru
      _
    // Predicated region
    $region30: #{_lambda_.1} parent=1 // pred_check
      _
    $region31: #{_lambda_.1} parent=1 // pred_check_branch
      %31 = sbr.rel (0) target = $region33
    $region32: #{_lambda_.1} parent=1 // pred_region
      %33 = vsyncadd [#allocation3], 0
      %s34 = sshll.u32 %s7, 4
      %s35 = int_to_ptr.hbm [resolvable:$true] %s34
      %s36 = sshll.u32 [#allocation2], 4
      %s37 = int_to_ptr.vmem [resolvable:$true] %s36
      %42 = dma.hbm_to_vmem [thread:$0]  %s35, 512, %s37, [#allocation3], 128, 128, 8
    $region33: #{_lambda_.1} parent=1 // pred_fallthru
      _
    // Predicated region
    $region34: #{_lambda_.1} parent=1 // pred_check
      _
    $region35: #{_lambda_.1} parent=1 // pred_check_branch
      %44 = sbr.rel (0) target = $region37
    $region36: #{_lambda_.1} parent=1 // pred_region
      _
    $region37: #{_lambda_.1} parent=1 // pred_fallthru
      _
    // Predicated region
    $region38: #{_lambda_.1} parent=1 // pred_check
      _
    $region39: #{_lambda_.1} parent=1 // pred_check_branch
      %46 = sbr.rel (0) target = $region41
    $region40: #{_lambda_.1} parent=1 // pred_region
      %48 = dma.done [#allocation3], 512
    $region41: #{_lambda_.1} parent=1 // pred_fallthru
      _
    %v49 = vld [vmem:[%s0] sm:$0x3]
    %v50 = vld [vmem:[%s1] sm:$0xff]
    %v51 = vld [vmem:[%s1 + $0x8] sm:$0xff]
    %v52 = vld [vmem:[%s1 + $0x10] sm:$0xff]
    %v53 = vld [vmem:[%s1 + $0x18] sm:$0xff]
    %v54 = vld [vmem:[%s1 + $0x20] sm:$0xff]
    %v55 = vld [vmem:[%s1 + $0x28] sm:$0xff]
    %v56 = vld [vmem:[%s1 + $0x30] sm:$0xff]
    %v57 = vld [vmem:[%s1 + $0x38] sm:$0xff]
    %v58 = vld [vmem:[%s2] sm:$0x1]
    %v60 = vperm.slane %v58, 0
    %vm62 = vcmask 523264
    %v64 = vsel %vm62, %v49, 0
    %66 = vmatpush.msra.mxu0 0.0
    %67 = vmatpush.msra.mxu0 0.0
    %68 = vmatpush.msra.mxu0 0.0
    %69 = vmatpush.msra.mxu0 0.0
    %70 = vmatpush.msra.mxu0 0.0
    %71 = vmatpush.msra.mxu0 0.0
    %72 = vmatpush.msra.mxu0 0.0
    %73 = vmatpush.msra.mxu0 0.0
    %74 = vmatpush.msra.mxu0 %v57
    %75 = vmatpush.msra.mxu0 %v56
    %76 = vmatpush.msra.mxu0 %v55
    %77 = vmatpush.msra.mxu0 %v54
    %78 = vmatpush.msra.mxu0 %v53
    %79 = vmatpush.msra.mxu0 %v52
    %80 = vmatpush.msra.mxu0 %v51
    %81 = vmatpush.msra.mxu0 %v50
    %82 = vmatmul.f32.gmra.mxu0 %v64
    %v83 = vpop.f32.mrf.mxu0
    %v84 = vadd.f32 %v60, %v83
    %85 = vdwg.mxu0
    %v86 = vmax.f32 %v84, 0.0
    %v87 = vld [vmem:[%s3] sm:$0xff]
    %v88 = vld [vmem:[%s3 + $0x8] sm:$0xff]
    %v89 = vld [vmem:[%s3 + $0x10] sm:$0xff]
    %v90 = vld [vmem:[%s3 + $0x18] sm:$0xff]
    %v91 = vld [vmem:[%s3 + $0x20] sm:$0xff]
    %v92 = vld [vmem:[%s3 + $0x28] sm:$0xff]
    %v93 = vld [vmem:[%s3 + $0x30] sm:$0xff]
    %v94 = vld [vmem:[%s3 + $0x38] sm:$0xff]
    %v95 = vld [vmem:[%s3 + $0x40] sm:$0xff]
    %v96 = vld [vmem:[%s3 + $0x48] sm:$0xff]
    %v97 = vld [vmem:[%s3 + $0x50] sm:$0xff]
    %v98 = vld [vmem:[%s3 + $0x58] sm:$0xff]
    %v99 = vld [vmem:[%s3 + $0x60] sm:$0xff]
    %v100 = vld [vmem:[%s3 + $0x68] sm:$0xff]
    %v101 = vld [vmem:[%s3 + $0x70] sm:$0xff]
    %v102 = vld [vmem:[%s3 + $0x78] sm:$0xff]
    %v103 = vld [vmem:[%s4] sm:$0x1]
    %v105 = vperm.slane %v103, 0
    %107 = vmatpush.msra.mxu0 %v102
    %108 = vmatpush.msra.mxu0 %v101
    %109 = vmatpush.msra.mxu0 %v100
    %110 = vmatpush.msra.mxu0 %v99
    %111 = vmatpush.msra.mxu0 %v98
    %112 = vmatpush.msra.mxu0 %v97
    %113 = vmatpush.msra.mxu0 %v96
    %114 = vmatpush.msra.mxu0 %v95
    %115 = vmatpush.msra.mxu0 %v94
    %116 = vmatpush.msra.mxu0 %v93
    %117 = vmatpush.msra.mxu0 %v92
    %118 = vmatpush.msra.mxu0 %v91
    %119 = vmatpush.msra.mxu0 %v90
    %120 = vmatpush.msra.mxu0 %v89
    %121 = vmatpush.msra.mxu0 %v88
    %122 = vmatpush.msra.mxu0 %v87
    %123 = vmatmul.f32.gmra.mxu0 %v86
    %v124 = vpop.f32.mrf.mxu0
    %v125 = vadd.f32 %v105, %v124
    %126 = vdwg.mxu0
    %v127 = vmax.f32 %v125, 0.0
    %v128 = vld [vmem:[%s5] sm:$0xff]
    %v129 = vld [vmem:[%s5 + $0x8] sm:$0xff]
    %v130 = vld [vmem:[%s5 + $0x10] sm:$0xff]
    %v131 = vld [vmem:[%s5 + $0x18] sm:$0xff]
    %v132 = vld [vmem:[%s5 + $0x20] sm:$0xff]
    %v133 = vld [vmem:[%s5 + $0x28] sm:$0xff]
    %v134 = vld [vmem:[%s5 + $0x30] sm:$0xff]
    %v135 = vld [vmem:[%s5 + $0x38] sm:$0xff]
    %v136 = vld [vmem:[%s5 + $0x40] sm:$0xff]
    %v137 = vld [vmem:[%s5 + $0x48] sm:$0xff]
    %v138 = vld [vmem:[%s5 + $0x50] sm:$0xff]
    %v139 = vld [vmem:[%s5 + $0x58] sm:$0xff]
    %v140 = vld [vmem:[%s5 + $0x60] sm:$0xff]
    %v141 = vld [vmem:[%s5 + $0x68] sm:$0xff]
    %v142 = vld [vmem:[%s5 + $0x70] sm:$0xff]
    %v143 = vld [vmem:[%s5 + $0x78] sm:$0xff]
    %v144 = vld [vmem:[%s6] sm:$0x1]
    %v146 = vperm.slane %v144, 0
    %148 = vmatpush.msra.mxu0 %v143
    %149 = vmatpush.msra.mxu0 %v142
    %150 = vmatpush.msra.mxu0 %v141
    %151 = vmatpush.msra.mxu0 %v140
    %152 = vmatpush.msra.mxu0 %v139
    %153 = vmatpush.msra.mxu0 %v138
    %154 = vmatpush.msra.mxu0 %v137
    %155 = vmatpush.msra.mxu0 %v136
    %156 = vmatpush.msra.mxu0 %v135
    %157 = vmatpush.msra.mxu0 %v134
    %158 = vmatpush.msra.mxu0 %v133
    %159 = vmatpush.msra.mxu0 %v132
    %160 = vmatpush.msra.mxu0 %v131
    %161 = vmatpush.msra.mxu0 %v130
    %162 = vmatpush.msra.mxu0 %v129
    %163 = vmatpush.msra.mxu0 %v128
    %164 = vmatmul.f32.gmra.mxu0 %v127
    %v165 = vpop.f32.mrf.mxu0
    %v166 = vadd.f32 %v146, %v165
    %167 = vdwg.mxu0
    %v168 = vmax.f32 %v166, 0.0
    %v169 = vld [vmem:[#allocation2] sm:$0xff]
    %v170 = vld [vmem:[#allocation2 + $0x8] sm:$0xff]
    %v171 = vld [vmem:[#allocation2 + $0x10] sm:$0xff]
    %v172 = vld [vmem:[#allocation2 + $0x18] sm:$0xff]
    %v173 = vld [vmem:[%s8] sm:$0x1]
    %v175 = vperm.slane %v173, 0
    %vm177 = vcmask 261120
    %v179 = vsel %vm177, %v168, 0
    %181 = vmatpush.msra.mxu0 0.0
    %182 = vmatpush.msra.mxu0 0.0
    %183 = vmatpush.msra.mxu0 0.0
    %184 = vmatpush.msra.mxu0 0.0
    %185 = vmatpush.msra.mxu0 0.0
    %186 = vmatpush.msra.mxu0 0.0
    %187 = vmatpush.msra.mxu0 0.0
    %188 = vmatpush.msra.mxu0 0.0
    %189 = vmatpush.msra.mxu0 0.0
    %190 = vmatpush.msra.mxu0 0.0
    %191 = vmatpush.msra.mxu0 0.0
    %192 = vmatpush.msra.mxu0 0.0
    %193 = vmatpush.msra.mxu0 %v172
    %194 = vmatpush.msra.mxu0 %v171
    %195 = vmatpush.msra.mxu0 %v170
    %196 = vmatpush.msra.mxu0 %v169
    %197 = vmatmul.f32.gmra.mxu0 %v179
    %v198 = vpop.f32.mrf.mxu0
    %v199 = vadd.f32 %v175, %v198
    %200 = vdwg.mxu0
    %201 = vst [vmem:[#allocation5] sm:$0x3] %v199
    // Predicated region
    $region42: #{_lambda_.1} parent=1 // pred_check
      _
    $region43: #{_lambda_.1} parent=1 // pred_check_branch
      %203 = sbr.rel (0) target = $region45
    $region44: #{_lambda_.1} parent=1 // pred_region
      %205 = vsyncadd [#allocation4], 0
      %s207 = sshll.u32 [#allocation5], 4
      %s208 = int_to_ptr.vmem [resolvable:$true] %s207
      %s209 = sshll.u32 %s9, 4
      %s210 = int_to_ptr.hbm [resolvable:$true] %s209
      %212 = dma.vmem_to_hbm [thread:$0]  %s208, 32, %s210, [#allocation4]
    $region45: #{_lambda_.1} parent=1 // pred_fallthru
      _
    // Predicated region
    $region46: #{_lambda_.1} parent=1 // pred_check
      _
    $region47: #{_lambda_.1} parent=1 // pred_check_branch
      %214 = sbr.rel (0) target = $region49
    $region48: #{_lambda_.1} parent=1 // pred_region
      %216 = dma.done [#allocation4], 32
    $region49: #{_lambda_.1} parent=1 // pred_fallthru
      _
    %217 = vsyncpa [#allocation3], 1
    %218 = vsyncpa [#allocation4], 1

</llo_original>
